<compile_context>
chip_gen: v6e
topology: v6e:2x2x1
jax: 0.10.0
libtpu: 0.0.40
codegen_flags: <defaults>
</compile_context>

<pallas_src>
import math
import functools

import jax
import jax.numpy as jnp
from jax import lax
from jax.experimental import pallas as pl
from jax.experimental.pallas import tpu as pltpu  # noqa: F401  (imported for TPU backend)


def _layernorm(h, w, b, eps=1e-5):
    # One-pass mean/variance (one fewer XLU reduction than the two-pass form);
    # matches PyTorch's biased-variance LayerNorm.
    mu = jnp.mean(h, axis=-1, keepdims=True)
    var = jnp.mean(h * h, axis=-1, keepdims=True) - mu * mu
    return (h - mu) * lax.rsqrt(var + eps) * w + b


def encoder_kernel(x_ref, pe_ref,
                   wqkv_ref, bqkv_ref,
                   wfc_ref, bfc_ref,
                   w1_ref, b1_ref, w2_ref, b2_ref,
                   lnw_ref, lnb_ref,
                   out_ref, *, B, S, D):
    # x_ref is (B*S, D): batch folded into rows so the projections / FC / FFN
    # matmuls and all element-wise work use every sublane.
    x = x_ref[...] + pe_ref[...]                               # (B*S, D) + (1, D)

    # Fused Q/K/V projection: one (B*S, D) x (D, 3D) MXU pass instead of three.
    qkv = jnp.dot(x, wqkv_ref[...],
                  preferred_element_type=jnp.float32) + bqkv_ref[...]
    q = qkv[:, 0 * D:1 * D].reshape(B, S, D)
    k = qkv[:, 1 * D:2 * D].reshape(B, S, D)
    v = qkv[:, 2 * D:3 * D].reshape(B, S, D)

    # Single-head scaled dot-product attention (num_head=1 -> d_k = D).
    scale = 1.0 / math.sqrt(D)
    score = jnp.einsum("bqd,bkd->bqk", q, k,
                       preferred_element_type=jnp.float32) * scale
    score = score - jnp.max(score, axis=-1, keepdims=True)
    p = jnp.exp(score)
    inv_den = pl.reciprocal(jnp.sum(p, axis=-1, keepdims=True), approx=True)
    coef = p * inv_den                                         # softmax over keys
    z = jnp.einsum("bqk,bkd->bqd", coef, v,
                   preferred_element_type=jnp.float32).reshape(B * S, D)

    attn = jnp.dot(z, wfc_ref[...],
                   preferred_element_type=jnp.float32) + bfc_ref[...]

    lnw = lnw_ref[...]                                         # hoisted, shared norm
    lnb = lnb_ref[...]
    h = _layernorm(x + attn, lnw, lnb)                         # norm(x + attention)

    # FeedForward: D -> D//2 -> D with ReLU (dropout = identity in eval mode).
    f = jnp.maximum(
        jnp.dot(h, w1_ref[...], preferred_element_type=jnp.float32) + b1_ref[...],
        0.0)
    ff = jnp.dot(f, w2_ref[...], preferred_element_type=jnp.float32) + b2_ref[...]
    y = _layernorm(h + ff, lnw, lnb)                           # norm(x + feedforward)

    out_ref[...] = y.astype(out_ref.dtype)


def encoder_forward(x, params):
    B, S, D = x.shape

    # Flatten batch into rows (free, row-major) so the kernel runs in a single
    # invocation with one contiguous output store.
    x2 = x.reshape(B * S, D)

    # Fuse the three projection weights/biases into one (D, 3D) operand.
    w_qkv = jnp.concatenate([params["wq"], params["wk"], params["wv"]], axis=1)
    b_qkv = jnp.concatenate([params["bq"], params["bk"], params["bv"]], axis=1)

    kernel = functools.partial(encoder_kernel, B=B, S=S, D=D)

    # No grid: all operands are small enough to live fully in VMEM; a single
    # kernel invocation avoids per-grid-step pipeline overhead entirely.
    # NOTE: matmul operands kept f32 here to preserve the strict numerical
    # check; cast weights/activations to bf16 (accumulate f32) for v6e/v7x at
    # realistic sizes.
    out = pl.pallas_call(
        kernel,
        out_shape=jax.ShapeDtypeStruct((B * S, D), jnp.float32),
    )(x2, params["pe_row"],
      w_qkv, b_qkv,
      params["wfc"], params["bfc"],
      params["w1"], params["b1"], params["w2"], params["b2"],
      params["ln_w"], params["ln_b"])

    return out.reshape(B, S, D)


# ---------------- parameter construction (deterministic, in-script) ----------------

def make_positional_encoding(max_len2, D):
    pos = jnp.arange(max_len2, dtype=jnp.float32)[:, None]
    div = jnp.exp(jnp.arange(0, D, 2, dtype=jnp.float32) * (-math.log(10000.0) / D))
    pe = jnp.zeros((max_len2, D), dtype=jnp.float32)
    pe = pe.at[:, 0::2].set(jnp.sin(pos * div))
    pe = pe.at[:, 1::2].set(jnp.cos(pos * div))
    return pe


def init_params(key, D, S, max_len):
    H = D // 2
    ks = jax.random.split(key, 12)

    def lin(kw, kb, fan_in, fan_out):
        bound = 1.0 / math.sqrt(fan_in)
        w = jax.random.uniform(kw, (fan_in, fan_out), jnp.float32, -bound, bound)
        b = jax.random.uniform(kb, (1, fan_out), jnp.float32, -bound, bound)
        return w, b

    wv, bv = lin(ks[0], ks[1], D, D)
    wq, bq = lin(ks[2], ks[3], D, D)
    wk, bk = lin(ks[4], ks[5], D, D)
    wfc, bfc = lin(ks[6], ks[7], D, D)
    w1, b1 = lin(ks[8], ks[9], D, H)
    w2, b2 = lin(ks[10], ks[11], H, D)

    pe = make_positional_encoding(max_len * 2, D)
    # Faithful to the module: it adds pe[:, x.size(1), :] (a single row at index S).
    pe_row = pe[S][None, :]

    return dict(pe_row=pe_row,
                wv=wv, bv=bv, wq=wq, bq=bq, wk=wk, bk=bk, wfc=wfc, bfc=bfc,
                w1=w1, b1=b1, w2=w2, b2=b2,
                ln_w=jnp.ones((1, D), jnp.float32),   # PyTorch LayerNorm default init
                ln_b=jnp.zeros((1, D), jnp.float32))


# ---------------- pure-JAX reference (for verification) ----------------

def reference_forward(x, p, d_k):
    def ln(h):
        mu = jnp.mean(h, axis=-1, keepdims=True)
        var = jnp.mean((h - mu) ** 2, axis=-1, keepdims=True)
        return (h - mu) / jnp.sqrt(var + 1e-5) * p["ln_w"] + p["ln_b"]

    x = x + p["pe_row"][None]
    v = x @ p["wv"] + p["bv"]
    q = x @ p["wq"] + p["bq"]
    k = x @ p["wk"] + p["bk"]
    score = jnp.einsum("bsd,btd->bst", q, k) / math.sqrt(d_k)
    coef = jax.nn.softmax(score, axis=-1)
    z = jnp.einsum("bst,btd->bsd", coef, v)
    attn = z @ p["wfc"] + p["bfc"]
    h = ln(x + attn)
    ff = jnp.maximum(h @ p["w1"] + p["b1"], 0.0) @ p["w2"] + p["b2"]
    return ln(h + ff)


if __name__ == "__main__":
    B, S, D, max_len = 2, 8, 32, 8   # input_dim=32, seq_len=8, num_head=1

    key = jax.random.PRNGKey(0)
    kx, kp = jax.random.split(key)
    x = jax.random.normal(kx, (B, S, D), dtype=jnp.float32)
    params = init_params(kp, D, S, max_len)

    out = encoder_forward(x, params)
    out = jax.block_until_ready(out)

    ref = reference_forward(x, params, d_k=D)
    assert out.shape == (B, S, D)
    # Tolerance accounts for the EUP approx reciprocal in the softmax and the
    # one-pass variance in LayerNorm.
    assert jnp.allclose(out, ref, rtol=2e-3, atol=2e-3), "mismatch vs JAX reference"

    print("KERNEL_OK")
</pallas_src>

<mosaic_0001>
module attributes {stable_mosaic.version = 11 : i64} {
  func.func @encoder_kernel(%arg0: memref<16x32xf32, #tpu.memory_space<vmem>>, %arg1: memref<1x32xf32, #tpu.memory_space<vmem>>, %arg2: memref<32x96xf32, #tpu.memory_space<vmem>>, %arg3: memref<1x96xf32, #tpu.memory_space<vmem>>, %arg4: memref<32x32xf32, #tpu.memory_space<vmem>>, %arg5: memref<1x32xf32, #tpu.memory_space<vmem>>, %arg6: memref<32x16xf32, #tpu.memory_space<vmem>>, %arg7: memref<1x16xf32, #tpu.memory_space<vmem>>, %arg8: memref<16x32xf32, #tpu.memory_space<vmem>>, %arg9: memref<1x32xf32, #tpu.memory_space<vmem>>, %arg10: memref<1x32xf32, #tpu.memory_space<vmem>>, %arg11: memref<1x32xf32, #tpu.memory_space<vmem>>, %arg12: memref<16x32xf32, #tpu.memory_space<vmem>>) attributes {dimension_semantics = [], scalar_prefetch = 0 : i64, scratch_operands = 0 : i64, tpu.core_type = #tpu.core_type<tc>} {
    %c0 = arith.constant 0 : index
    %c0_0 = arith.constant 0 : index
    %0 = vector.load %arg0[%c0, %c0_0] : memref<16x32xf32, #tpu.memory_space<vmem>>, vector<16x32xf32>
    %c0_1 = arith.constant 0 : index
    %c0_2 = arith.constant 0 : index
    %1 = vector.load %arg1[%c0_1, %c0_2] : memref<1x32xf32, #tpu.memory_space<vmem>>, vector<1x32xf32>
    %2 = vector.broadcast %1 : vector<1x32xf32> to vector<16x32xf32>
    %3 = arith.addf %0, %2 : vector<16x32xf32>
    %c0_3 = arith.constant 0 : index
    %c0_4 = arith.constant 0 : index
    %4 = vector.load %arg2[%c0_3, %c0_4] : memref<32x96xf32, #tpu.memory_space<vmem>>, vector<32x96xf32>
    %cst = arith.constant dense<0.000000e+00> : vector<16x96xf32>
    %5 = tpu.matmul %3, %4, %cst {dimension_numbers = #tpu.dot_dimension_numbers<[1], [0], [0], [1], [0, 0, 1, 1], [], []>} : vector<16x32xf32>, vector<32x96xf32>, vector<16x96xf32> -> vector<16x96xf32>
    %c0_5 = arith.constant 0 : index
    %c0_6 = arith.constant 0 : index
    %6 = vector.load %arg3[%c0_5, %c0_6] : memref<1x96xf32, #tpu.memory_space<vmem>>, vector<1x96xf32>
    %7 = vector.broadcast %6 : vector<1x96xf32> to vector<16x96xf32>
    %8 = arith.addf %5, %7 : vector<16x96xf32>
    %9 = vector.extract_strided_slice %8 {offsets = [0, 0], sizes = [16, 32], strides = [1, 1]} : vector<16x96xf32> to vector<16x32xf32>
    %10 = vector.shape_cast %9 : vector<16x32xf32> to vector<2x8x32xf32>
    %11 = vector.extract_strided_slice %8 {offsets = [0, 32], sizes = [16, 32], strides = [1, 1]} : vector<16x96xf32> to vector<16x32xf32>
    %12 = vector.shape_cast %11 : vector<16x32xf32> to vector<2x8x32xf32>
    %13 = vector.extract_strided_slice %8 {offsets = [0, 64], sizes = [16, 32], strides = [1, 1]} : vector<16x96xf32> to vector<16x32xf32>
    %14 = vector.shape_cast %13 : vector<16x32xf32> to vector<2x8x32xf32>
    "tpu.trace_start"() <{level = 10 : i32, message = "bqd,bkd->bqk"}> : () -> ()
    %cst_7 = arith.constant dense<0.000000e+00> : vector<2x8x8xf32>
    %15 = tpu.matmul %10, %12, %cst_7 {dimension_numbers = #tpu.dot_dimension_numbers<[2], [2], [1], [1], [0, 0, 0, 1, 1, 1], [0], [0]>} : vector<2x8x32xf32>, vector<2x8x32xf32>, vector<2x8x8xf32> -> vector<2x8x8xf32>
    "tpu.trace_stop"() : () -> ()
    %cst_8 = arith.constant 0.176776692 : f32
    %16 = vector.broadcast %cst_8 : f32 to vector<2x8x8xf32>
    %17 = arith.mulf %15, %16 : vector<2x8x8xf32>
    %cst_9 = arith.constant dense<0xFF800000> : vector<2x8xf32>
    %18 = vector.multi_reduction <maximumf>, %17, %cst_9 [2] : vector<2x8x8xf32> to vector<2x8xf32>
    %19 = vector.shape_cast %18 : vector<2x8xf32> to vector<2x8x1xf32>
    %20 = vector.broadcast %19 : vector<2x8x1xf32> to vector<2x8x8xf32>
    %21 = arith.subf %17, %20 : vector<2x8x8xf32>
    %22 = math.exp %21 : vector<2x8x8xf32>
    %cst_10 = arith.constant dense<0.000000e+00> : vector<2x8xf32>
    %23 = vector.multi_reduction <add>, %22, %cst_10 [2] : vector<2x8x8xf32> to vector<2x8xf32>
    %24 = vector.shape_cast %23 : vector<2x8xf32> to vector<2x8x1xf32>
    %25 = tpu.reciprocal %24 {approx = true} : vector<2x8x1xf32> -> vector<2x8x1xf32>
    %26 = vector.broadcast %25 : vector<2x8x1xf32> to vector<2x8x8xf32>
    %27 = arith.mulf %22, %26 : vector<2x8x8xf32>
    "tpu.trace_start"() <{level = 10 : i32, message = "bqk,bkd->bqd"}> : () -> ()
    %cst_11 = arith.constant dense<0.000000e+00> : vector<2x8x32xf32>
    %28 = tpu.matmul %27, %14, %cst_11 {dimension_numbers = #tpu.dot_dimension_numbers<[2], [1], [1], [2], [0, 0, 0, 1, 1, 2], [0], [0]>} : vector<2x8x8xf32>, vector<2x8x32xf32>, vector<2x8x32xf32> -> vector<2x8x32xf32>
    "tpu.trace_stop"() : () -> ()
    %29 = vector.shape_cast %28 : vector<2x8x32xf32> to vector<16x32xf32>
    %c0_12 = arith.constant 0 : index
    %c0_13 = arith.constant 0 : index
    %30 = vector.load %arg4[%c0_12, %c0_13] : memref<32x32xf32, #tpu.memory_space<vmem>>, vector<32x32xf32>
    %cst_14 = arith.constant dense<0.000000e+00> : vector<16x32xf32>
    %31 = tpu.matmul %29, %30, %cst_14 {dimension_numbers = #tpu.dot_dimension_numbers<[1], [0], [0], [1], [0, 0, 1, 1], [], []>} : vector<16x32xf32>, vector<32x32xf32>, vector<16x32xf32> -> vector<16x32xf32>
    %c0_15 = arith.constant 0 : index
    %c0_16 = arith.constant 0 : index
    %32 = vector.load %arg5[%c0_15, %c0_16] : memref<1x32xf32, #tpu.memory_space<vmem>>, vector<1x32xf32>
    %33 = vector.broadcast %32 : vector<1x32xf32> to vector<16x32xf32>
    %34 = arith.addf %31, %33 : vector<16x32xf32>
    %c0_17 = arith.constant 0 : index
    %c0_18 = arith.constant 0 : index
    %35 = vector.load %arg10[%c0_17, %c0_18] : memref<1x32xf32, #tpu.memory_space<vmem>>, vector<1x32xf32>
    %c0_19 = arith.constant 0 : index
    %c0_20 = arith.constant 0 : index
    %36 = vector.load %arg11[%c0_19, %c0_20] : memref<1x32xf32, #tpu.memory_space<vmem>>, vector<1x32xf32>
    %37 = arith.addf %3, %34 : vector<16x32xf32>
    %cst_21 = arith.constant dense<0.000000e+00> : vector<16xf32>
    %38 = vector.multi_reduction <add>, %37, %cst_21 [1] : vector<16x32xf32> to vector<16xf32>
    %39 = vector.shape_cast %38 : vector<16xf32> to vector<16x1xf32>
    %cst_22 = arith.constant 3.200000e+01 : f32
    %40 = vector.broadcast %cst_22 : f32 to vector<16x1xf32>
    %41 = arith.divf %39, %40 : vector<16x1xf32>
    %42 = arith.mulf %37, %37 : vector<16x32xf32>
    %cst_23 = arith.constant dense<0.000000e+00> : vector<16xf32>
    %43 = vector.multi_reduction <add>, %42, %cst_23 [1] : vector<16x32xf32> to vector<16xf32>
    %44 = vector.shape_cast %43 : vector<16xf32> to vector<16x1xf32>
    %cst_24 = arith.constant 3.200000e+01 : f32
    %45 = vector.broadcast %cst_24 : f32 to vector<16x1xf32>
    %46 = arith.divf %44, %45 : vector<16x1xf32>
    %47 = arith.mulf %41, %41 : vector<16x1xf32>
    %48 = arith.subf %46, %47 : vector<16x1xf32>
    %49 = vector.broadcast %41 : vector<16x1xf32> to vector<16x32xf32>
    %50 = arith.subf %37, %49 : vector<16x32xf32>
    %cst_25 = arith.constant 9.99999974E-6 : f32
    %51 = vector.broadcast %cst_25 : f32 to vector<16x1xf32>
    %52 = arith.addf %48, %51 : vector<16x1xf32>
    %53 = math.rsqrt %52 : vector<16x1xf32>
    %54 = vector.broadcast %53 : vector<16x1xf32> to vector<16x32xf32>
    %55 = arith.mulf %50, %54 : vector<16x32xf32>
    %56 = vector.broadcast %35 : vector<1x32xf32> to vector<16x32xf32>
    %57 = arith.mulf %55, %56 : vector<16x32xf32>
    %58 = vector.broadcast %36 : vector<1x32xf32> to vector<16x32xf32>
    %59 = arith.addf %57, %58 : vector<16x32xf32>
    %c0_26 = arith.constant 0 : index
    %c0_27 = arith.constant 0 : index
    %60 = vector.load %arg6[%c0_26, %c0_27] : memref<32x16xf32, #tpu.memory_space<vmem>>, vector<32x16xf32>
    %cst_28 = arith.constant dense<0.000000e+00> : vector<16x16xf32>
    %61 = tpu.matmul %59, %60, %cst_28 {dimension_numbers = #tpu.dot_dimension_numbers<[1], [0], [0], [1], [0, 0, 1, 1], [], []>} : vector<16x32xf32>, vector<32x16xf32>, vector<16x16xf32> -> vector<16x16xf32>
    %c0_29 = arith.constant 0 : index
    %c0_30 = arith.constant 0 : index
    %62 = vector.load %arg7[%c0_29, %c0_30] : memref<1x16xf32, #tpu.memory_space<vmem>>, vector<1x16xf32>
    %63 = vector.broadcast %62 : vector<1x16xf32> to vector<16x16xf32>
    %64 = arith.addf %61, %63 : vector<16x16xf32>
    %cst_31 = arith.constant 0.000000e+00 : f32
    %65 = vector.broadcast %cst_31 : f32 to vector<16x16xf32>
    %66 = arith.maximumf %64, %65 : vector<16x16xf32>
    %c0_32 = arith.constant 0 : index
    %c0_33 = arith.constant 0 : index
    %67 = vector.load %arg8[%c0_32, %c0_33] : memref<16x32xf32, #tpu.memory_space<vmem>>, vector<16x32xf32>
    %cst_34 = arith.constant dense<0.000000e+00> : vector<16x32xf32>
    %68 = tpu.matmul %66, %67, %cst_34 {dimension_numbers = #tpu.dot_dimension_numbers<[1], [0], [0], [1], [0, 0, 1, 1], [], []>} : vector<16x16xf32>, vector<16x32xf32>, vector<16x32xf32> -> vector<16x32xf32>
    %c0_35 = arith.constant 0 : index
    %c0_36 = arith.constant 0 : index
    %69 = vector.load %arg9[%c0_35, %c0_36] : memref<1x32xf32, #tpu.memory_space<vmem>>, vector<1x32xf32>
    %70 = vector.broadcast %69 : vector<1x32xf32> to vector<16x32xf32>
    %71 = arith.addf %68, %70 : vector<16x32xf32>
    %72 = arith.addf %59, %71 : vector<16x32xf32>
    %cst_37 = arith.constant dense<0.000000e+00> : vector<16xf32>
    %73 = vector.multi_reduction <add>, %72, %cst_37 [1] : vector<16x32xf32> to vector<16xf32>
    %74 = vector.shape_cast %73 : vector<16xf32> to vector<16x1xf32>
    %cst_38 = arith.constant 3.200000e+01 : f32
    %75 = vector.broadcast %cst_38 : f32 to vector<16x1xf32>
    %76 = arith.divf %74, %75 : vector<16x1xf32>
    %77 = arith.mulf %72, %72 : vector<16x32xf32>
    %cst_39 = arith.constant dense<0.000000e+00> : vector<16xf32>
    %78 = vector.multi_reduction <add>, %77, %cst_39 [1] : vector<16x32xf32> to vector<16xf32>
    %79 = vector.shape_cast %78 : vector<16xf32> to vector<16x1xf32>
    %cst_40 = arith.constant 3.200000e+01 : f32
    %80 = vector.broadcast %cst_40 : f32 to vector<16x1xf32>
    %81 = arith.divf %79, %80 : vector<16x1xf32>
    %82 = arith.mulf %76, %76 : vector<16x1xf32>
    %83 = arith.subf %81, %82 : vector<16x1xf32>
    %84 = vector.broadcast %76 : vector<16x1xf32> to vector<16x32xf32>
    %85 = arith.subf %72, %84 : vector<16x32xf32>
    %cst_41 = arith.constant 9.99999974E-6 : f32
    %86 = vector.broadcast %cst_41 : f32 to vector<16x1xf32>
    %87 = arith.addf %83, %86 : vector<16x1xf32>
    %88 = math.rsqrt %87 : vector<16x1xf32>
    %89 = vector.broadcast %88 : vector<16x1xf32> to vector<16x32xf32>
    %90 = arith.mulf %85, %89 : vector<16x32xf32>
    %91 = vector.broadcast %35 : vector<1x32xf32> to vector<16x32xf32>
    %92 = arith.mulf %90, %91 : vector<16x32xf32>
    %93 = vector.broadcast %36 : vector<1x32xf32> to vector<16x32xf32>
    %94 = arith.addf %92, %93 : vector<16x32xf32>
    %c0_42 = arith.constant 0 : index
    %c0_43 = arith.constant 0 : index
    %95 = vector.load %arg12[%c0_42, %c0_43] : memref<16x32xf32, #tpu.memory_space<vmem>>, vector<16x32xf32>
    tpu.vector_store %arg12[%c0_42, %c0_43], %94 {strides = array<i32>} : memref<16x32xf32, #tpu.memory_space<vmem>>, vector<16x32xf32>,
    return
  }
}

</mosaic_0001>

<llo_original>
// kernel: tpu_custom_call.1
$region0: #{tpu_custom_call.1}
  #allocation0 [shape = 'u32[]', space=smem, size = 0x4, offset = 0x4, fixed_abs, tag = 'smem constant byte address 0x4 - core index']
  #allocation1 [shape = 'u32[144,128]{1,0:T(1,128)}', space=vmem, size = 0x12000, scoped, tag = 'internal scratch']
  %s0 = inlined_call_operand.vmem [shape: f32[16,32], index: 0, kind: input, shape index: {}]
  %s1 = inlined_call_operand.vmem [shape: f32[1,32], index: 1, kind: input, shape index: {}]
  %s2 = inlined_call_operand.vmem [shape: f32[32,96], index: 2, kind: input, shape index: {}]
  %s3 = inlined_call_operand.vmem [shape: f32[1,96], index: 3, kind: input, shape index: {}]
  %s4 = inlined_call_operand.hbm [shape: f32[32,32], index: 4, kind: input, shape index: {}]
  %s5 = inlined_call_operand.vmem [shape: f32[1,32], index: 5, kind: input, shape index: {}]
  %s6 = inlined_call_operand.vmem [shape: f32[32,16], index: 6, kind: input, shape index: {}]
  %s7 = inlined_call_operand.vmem [shape: f32[1,16], index: 7, kind: input, shape index: {}]
  %s8 = inlined_call_operand.hbm [shape: f32[16,32], index: 8, kind: input, shape index: {}]
  %s9 = inlined_call_operand.vmem [shape: f32[1,32], index: 9, kind: input, shape index: {}]
  %s10 = inlined_call_operand.vmem [shape: f32[1,32], index: 10, kind: input, shape index: {}]
  %s11 = inlined_call_operand.vmem [shape: f32[1,32], index: 11, kind: input, shape index: {}]
  %s12 = inlined_call_operand.hbm [shape: f32[16,32], index: 12, kind: output, shape index: {}]
  %s13 = sld [smem:[#allocation0]]
  $region66: #{tpu_custom_call.1} parent=0
    _
  %s15 = ssub.s32 1, %s13
  %s16 = scalar_select 0, %s15, %s13
  $region1: #{tpu_custom_call.1} parent=0
    #allocation2 [shape = 'u8[16384]{0}', space=vmem, size = 0x4000, scoped, tag = 'input window, operand 4, single buffered']
    #allocation3 [shape = 's32[1]{0}', space=sflag, size = 0x4, scoped, tag = 'scoped memory for tpu_custom_call.1']
    #allocation4 [shape = 's32[1]{0}', space=sflag, size = 0x4, scoped, tag = 'scoped memory for tpu_custom_call.1']
    #allocation5 [shape = 'u8[8192]{0}', space=vmem, size = 0x2000, scoped, tag = 'input window, operand 8, single buffered']
    #allocation6 [shape = 's32[1]{0}', space=sflag, size = 0x4, scoped, tag = 'scoped memory for tpu_custom_call.1']
    #allocation7 [shape = 'u8[8192]{0}', space=vmem, size = 0x2000, scoped, tag = 'output window, operand 0, single buffered']
    %17 = vsyncpa [#allocation3], 0
    %18 = vsyncpa [#allocation6], 0
    %19 = vsyncpa [#allocation4], 0
    // Predicated region
    $region2: #{tpu_custom_call.1} parent=1 // pred_check
      _
    $region3: #{tpu_custom_call.1} parent=1 // pred_check_branch
      %21 = sbr.rel (0) target = $region5
    $region4: #{tpu_custom_call.1} parent=1 // pred_region
      _
    $region5: #{tpu_custom_call.1} parent=1 // pred_fallthru
      _
    // Predicated region
    $region6: #{tpu_custom_call.1} parent=1 // pred_check
      _
    $region7: #{tpu_custom_call.1} parent=1 // pred_check_branch
      %23 = sbr.rel (0) target = $region9
    $region8: #{tpu_custom_call.1} parent=1 // pred_region
      _
    $region9: #{tpu_custom_call.1} parent=1 // pred_fallthru
      _
    // Predicated region
    $region10: #{tpu_custom_call.1} parent=1 // pred_check
      _
    $region11: #{tpu_custom_call.1} parent=1 // pred_check_branch
      %25 = sbr.rel (0) target = $region13
    $region12: #{tpu_custom_call.1} parent=1 // pred_region
      _
    $region13: #{tpu_custom_call.1} parent=1 // pred_fallthru
      _
    // Predicated region
    $region14: #{tpu_custom_call.1} parent=1 // pred_check
      _
    $region15: #{tpu_custom_call.1} parent=1 // pred_check_branch
      %27 = sbr.rel (0) target = $region17
    $region16: #{tpu_custom_call.1} parent=1 // pred_region
      _
    $region17: #{tpu_custom_call.1} parent=1 // pred_fallthru
      _
    // Predicated region
    $region18: #{tpu_custom_call.1} parent=1 // pred_check
      _
    $region19: #{tpu_custom_call.1} parent=1 // pred_check_branch
      %29 = sbr.rel (0) target = $region21
    $region20: #{tpu_custom_call.1} parent=1 // pred_region
      %s31 = ssub.s32 512, 512
      %32 = vsyncadd [#allocation3], %s31
      %s33 = sshll.u32 [#allocation2], 4
      %s34 = int_to_ptr.vmem [resolvable:$true] %s33
      %39 = dma.hbm_to_vmem [thread:$0]  %s4, 512, %s34, [#allocation3], 128, 128, 8
    $region21: #{tpu_custom_call.1} parent=1 // pred_fallthru
      _
    // Predicated region
    $region22: #{tpu_custom_call.1} parent=1 // pred_check
      _
    $region23: #{tpu_custom_call.1} parent=1 // pred_check_branch
      %41 = sbr.rel (0) target = $region25
    $region24: #{tpu_custom_call.1} parent=1 // pred_region
      _
    $region25: #{tpu_custom_call.1} parent=1 // pred_fallthru
      _
    // Predicated region
    $region26: #{tpu_custom_call.1} parent=1 // pred_check
      _
    $region27: #{tpu_custom_call.1} parent=1 // pred_check_branch
      %43 = sbr.rel (0) target = $region29
    $region28: #{tpu_custom_call.1} parent=1 // pred_region
      _
    $region29: #{tpu_custom_call.1} parent=1 // pred_fallthru
      _
    // Predicated region
    $region30: #{tpu_custom_call.1} parent=1 // pred_check
      _
    $region31: #{tpu_custom_call.1} parent=1 // pred_check_branch
      %45 = sbr.rel (0) target = $region33
    $region32: #{tpu_custom_call.1} parent=1 // pred_region
      _
    $region33: #{tpu_custom_call.1} parent=1 // pred_fallthru
      _
    // Predicated region
    $region34: #{tpu_custom_call.1} parent=1 // pred_check
      _
    $region35: #{tpu_custom_call.1} parent=1 // pred_check_branch
      %47 = sbr.rel (0) target = $region37
    $region36: #{tpu_custom_call.1} parent=1 // pred_region
      %s49 = ssub.s32 256, 256
      %50 = vsyncadd [#allocation6], %s49
      %s51 = sshll.u32 [#allocation5], 4
      %s52 = int_to_ptr.vmem [resolvable:$true] %s51
      %57 = dma.hbm_to_vmem [thread:$0]  %s8, 256, %s52, [#allocation6], 128, 128, 8
    $region37: #{tpu_custom_call.1} parent=1 // pred_fallthru
      _
    // Predicated region
    $region38: #{tpu_custom_call.1} parent=1 // pred_check
      _
    $region39: #{tpu_custom_call.1} parent=1 // pred_check_branch
      %59 = sbr.rel (0) target = $region41
    $region40: #{tpu_custom_call.1} parent=1 // pred_region
      _
    $region41: #{tpu_custom_call.1} parent=1 // pred_fallthru
      _
    // Predicated region
    $region42: #{tpu_custom_call.1} parent=1 // pred_check
      _
    $region43: #{tpu_custom_call.1} parent=1 // pred_check_branch
      %61 = sbr.rel (0) target = $region45
    $region44: #{tpu_custom_call.1} parent=1 // pred_region
      _
    $region45: #{tpu_custom_call.1} parent=1 // pred_fallthru
      _
    // Predicated region
    $region46: #{tpu_custom_call.1} parent=1 // pred_check
      _
    $region47: #{tpu_custom_call.1} parent=1 // pred_check_branch
      %63 = sbr.rel (0) target = $region49
    $region48: #{tpu_custom_call.1} parent=1 // pred_region
      _
    $region49: #{tpu_custom_call.1} parent=1 // pred_fallthru
      _
    // Predicated region
    $region50: #{tpu_custom_call.1} parent=1 // pred_check
      _
    $region51: #{tpu_custom_call.1} parent=1 // pred_check_branch
      %65 = sbr.rel (0) target = $region53
    $region52: #{tpu_custom_call.1} parent=1 // pred_region
      %66 = dma.done [#allocation3], 512
    $region53: #{tpu_custom_call.1} parent=1 // pred_fallthru
      _
    // Predicated region
    $region54: #{tpu_custom_call.1} parent=1 // pred_check
      _
    $region55: #{tpu_custom_call.1} parent=1 // pred_check_branch
      %68 = sbr.rel (0) target = $region57
    $region56: #{tpu_custom_call.1} parent=1 // pred_region
      %69 = dma.done [#allocation6], 256
    $region57: #{tpu_custom_call.1} parent=1 // pred_fallthru
      _
    %v70 = vld [vmem:[%s0] sm:$0xff]
    %v71 = vld [vmem:[%s0 + $0x8] sm:$0xff]
    %v72 = vld [vmem:[%s1] sm:$0x1]
    %v74 = vlaneseq
    %v75 = vshrl.u32 %v74, 7
    %v76 = vsub.s32 0, %v75
    %v77 = vrot.slane %v72, %v76
    %v79 = vadd.f32 %v70, %v77
    %v80 = vadd.f32 %v71, %v77
    %v81 = vld [vmem:[%s2] sm:$0xff]
    %v82 = vld [vmem:[%s2 + $0x8] sm:$0xff]
    %v83 = vld [vmem:[%s2 + $0x10] sm:$0xff]
    %v84 = vld [vmem:[%s2 + $0x18] sm:$0xff]
    %v85 = vld [vmem:[%s3] sm:$0x1]
    %v87 = vlaneseq
    %v88 = vshrl.u32 %v87, 7
    %v89 = vsub.s32 0, %v88
    %v90 = vrot.slane %v85, %v89
    %vm92 = vcmask 261120
    %v94 = vsel %vm92, %v79, 0
    %v97 = vsel %vm92, %v80, 0
    %99 = vmatprep.subr.mxu0 0.0
    %100 = vmatpush1.msra.mxu0 0.0
    %101 = vmatprep.subr.mxu0 0.0
    %102 = vmatpush1.msra.mxu0 0.0
    %103 = vmatprep.subr.mxu0 0.0
    %104 = vmatpush1.msra.mxu0 0.0
    %105 = vmatprep.subr.mxu0 0.0
    %106 = vmatpush1.msra.mxu0 0.0
    %107 = vmatprep.subr.mxu0 0.0
    %108 = vmatpush1.msra.mxu0 0.0
    %109 = vmatprep.subr.mxu0 0.0
    %110 = vmatpush1.msra.mxu0 0.0
    %111 = vmatprep.subr.mxu0 0.0
    %112 = vmatpush1.msra.mxu0 0.0
    %113 = vmatprep.subr.mxu0 0.0
    %114 = vmatpush1.msra.mxu0 0.0
    %115 = vmatprep.subr.mxu0 0.0
    %116 = vmatpush1.msra.mxu0 0.0
    %117 = vmatprep.subr.mxu0 0.0
    %118 = vmatpush1.msra.mxu0 0.0
    %119 = vmatprep.subr.mxu0 0.0
    %120 = vmatpush1.msra.mxu0 0.0
    %121 = vmatprep.subr.mxu0 0.0
    %122 = vmatpush1.msra.mxu0 0.0
    %123 = vmatprep.subr.mxu0 0.0
    %124 = vmatpush1.msra.mxu0 %v84
    %125 = vmatprep.subr.mxu0 0.0
    %126 = vmatpush1.msra.mxu0 %v83
    %127 = vmatprep.subr.mxu0 0.0
    %128 = vmatpush1.msra.mxu0 %v82
    %129 = vmatprep.subr.mxu0 0.0
    %130 = vmatpush1.msra.mxu0 %v81
    %131 = vmatprep.subr.mxu0 0.0
    %132 = vmatpush2.msra.mxu0 0.0
    %133 = vmatprep.subr.mxu0 0.0
    %134 = vmatpush2.msra.mxu0 0.0
    %135 = vmatprep.subr.mxu0 0.0
    %136 = vmatpush2.msra.mxu0 0.0
    %137 = vmatprep.subr.mxu0 0.0
    %138 = vmatpush2.msra.mxu0 0.0
    %139 = vmatprep.subr.mxu0 0.0
    %140 = vmatpush2.msra.mxu0 0.0
    %141 = vmatprep.subr.mxu0 0.0
    %142 = vmatpush2.msra.mxu0 0.0
    %143 = vmatprep.subr.mxu0 0.0
    %144 = vmatpush2.msra.mxu0 0.0
    %145 = vmatprep.subr.mxu0 0.0
    %146 = vmatpush2.msra.mxu0 0.0
    %147 = vmatprep.subr.mxu0 0.0
    %148 = vmatpush2.msra.mxu0 0.0
    %149 = vmatprep.subr.mxu0 0.0
    %150 = vmatpush2.msra.mxu0 0.0
    %151 = vmatprep.subr.mxu0 0.0
    %152 = vmatpush2.msra.mxu0 0.0
    %153 = vmatprep.subr.mxu0 0.0
    %154 = vmatpush2.msra.mxu0 0.0
    %155 = vmatprep.subr.mxu0 0.0
    %156 = vmatpush2.msra.mxu0 0.0
    %157 = vmatprep.subr.mxu0 0.0
    %158 = vmatpush2.msra.mxu0 0.0
    %159 = vmatprep.subr.mxu0 0.0
    %160 = vmatpush2.msra.mxu0 0.0
    %161 = vmatprep.subr.mxu0 0.0
    %162 = vmatpush2.msra.mxu0 0.0
    %163 = vmatprep.mubr.f32.mxu0 0.0
    %164 = vmatmul.mubr.f32.gmra.mxu0 %v94
    %v165 = vpop.f32.mrf.mxu0
    %v166 = vadd.f32 %v90, %v165
    %v167 = vpop.f32.mrf.mxu0
    %168 = vmatprep.mubr.f32.mxu0 0.0
    %169 = vmatmul.mubr.f32.gmra.mxu0 %v97
    %v170 = vpop.f32.mrf.mxu0
    %v171 = vadd.f32 %v90, %v170
    %v172 = vpop.f32.mrf.mxu0
    %173 = vdwg.mxu0
    %175 = vrot.lane.b32.xlu0 %v166, 96
    %v176 = vpop.permute.xlu0 %175
    %v177 = vsel %vm92, %v166, 0
    %v179 = vsel %vm92, %v176, 0
    %181 = vmatprep.subr.mxu0 0.0
    %182 = vmatpush1.xpose.msra.mxu0 0.0
    %183 = vmatprep.subr.mxu0 0.0
    %184 = vmatpush1.xpose.msra.mxu0 0.0
    %185 = vmatprep.subr.mxu0 0.0
    %186 = vmatpush1.xpose.msra.mxu0 0.0
    %187 = vmatprep.subr.mxu0 0.0
    %188 = vmatpush1.xpose.msra.mxu0 0.0
    %189 = vmatprep.subr.mxu0 0.0
    %190 = vmatpush1.xpose.msra.mxu0 0.0
    %191 = vmatprep.subr.mxu0 0.0
    %192 = vmatpush1.xpose.msra.mxu0 0.0
    %193 = vmatprep.subr.mxu0 0.0
    %194 = vmatpush1.xpose.msra.mxu0 0.0
    %195 = vmatprep.subr.mxu0 0.0
    %196 = vmatpush1.xpose.msra.mxu0 0.0
    %197 = vmatprep.subr.mxu0 0.0
    %198 = vmatpush1.xpose.msra.mxu0 0.0
    %199 = vmatprep.subr.mxu0 0.0
    %200 = vmatpush1.xpose.msra.mxu0 0.0
    %201 = vmatprep.subr.mxu0 0.0
    %202 = vmatpush1.xpose.msra.mxu0 0.0
    %203 = vmatprep.subr.mxu0 0.0
    %204 = vmatpush1.xpose.msra.mxu0 0.0
    %205 = vmatprep.subr.mxu0 0.0
    %206 = vmatpush1.xpose.msra.mxu0 0.0
    %207 = vmatprep.subr.mxu0 0.0
    %208 = vmatpush1.xpose.msra.mxu0 0.0
    %209 = vmatprep.subr.mxu0 0.0
    %210 = vmatpush1.xpose.msra.mxu0 0.0
    %211 = vmatprep.subr.mxu0 0.0
    %212 = vmatpush1.xpose.msra.mxu0 %v179
    %213 = vmatprep.subr.mxu0 0.0
    %214 = vmatpush2.xpose.msra.mxu0 0.0
    %215 = vmatprep.subr.mxu0 0.0
    %216 = vmatpush2.xpose.msra.mxu0 0.0
    %217 = vmatprep.subr.mxu0 0.0
    %218 = vmatpush2.xpose.msra.mxu0 0.0
    %219 = vmatprep.subr.mxu0 0.0
    %220 = vmatpush2.xpose.msra.mxu0 0.0
    %221 = vmatprep.subr.mxu0 0.0
    %222 = vmatpush2.xpose.msra.mxu0 0.0
    %223 = vmatprep.subr.mxu0 0.0
    %224 = vmatpush2.xpose.msra.mxu0 0.0
    %225 = vmatprep.subr.mxu0 0.0
    %226 = vmatpush2.xpose.msra.mxu0 0.0
    %227 = vmatprep.subr.mxu0 0.0
    %228 = vmatpush2.xpose.msra.mxu0 0.0
    %229 = vmatprep.subr.mxu0 0.0
    %230 = vmatpush2.xpose.msra.mxu0 0.0
    %231 = vmatprep.subr.mxu0 0.0
    %232 = vmatpush2.xpose.msra.mxu0 0.0
    %233 = vmatprep.subr.mxu0 0.0
    %234 = vmatpush2.xpose.msra.mxu0 0.0
    %235 = vmatprep.subr.mxu0 0.0
    %236 = vmatpush2.xpose.msra.mxu0 0.0
    %237 = vmatprep.subr.mxu0 0.0
    %238 = vmatpush2.xpose.msra.mxu0 0.0
    %239 = vmatprep.subr.mxu0 0.0
    %240 = vmatpush2.xpose.msra.mxu0 0.0
    %241 = vmatprep.subr.mxu0 0.0
    %242 = vmatpush2.xpose.msra.mxu0 0.0
    %243 = vmatprep.subr.mxu0 0.0
    %244 = vmatpush2.xpose.msra.mxu0 0.0
    %245 = vmatprep.mubr.f32.mxu0 0.0
    %246 = vmatmul.mubr.f32.gmra.mxu0 %v177
    %v247 = vpop.f32.mrf.mxu0
    %v248 = vadd.f32 0.0, %v247
    %v249 = vpop.f32.mrf.mxu0
    %250 = vdwg.mxu0
    %252 = vrot.lane.b32.xlu0 %v171, 96
    %v253 = vpop.permute.xlu0 %252
    %v254 = vsel %vm92, %v171, 0
    %v256 = vsel %vm92, %v253, 0
    %258 = vmatprep.subr.mxu0 0.0
    %259 = vmatpush1.xpose.msra.mxu0 0.0
    %260 = vmatprep.subr.mxu0 0.0
    %261 = vmatpush1.xpose.msra.mxu0 0.0
    %262 = vmatprep.subr.mxu0 0.0
    %263 = vmatpush1.xpose.msra.mxu0 0.0
    %264 = vmatprep.subr.mxu0 0.0
    %265 = vmatpush1.xpose.msra.mxu0 0.0
    %266 = vmatprep.subr.mxu0 0.0
    %267 = vmatpush1.xpose.msra.mxu0 0.0
    %268 = vmatprep.subr.mxu0 0.0
    %269 = vmatpush1.xpose.msra.mxu0 0.0
    %270 = vmatprep.subr.mxu0 0.0
    %271 = vmatpush1.xpose.msra.mxu0 0.0
    %272 = vmatprep.subr.mxu0 0.0
    %273 = vmatpush1.xpose.msra.mxu0 0.0
    %274 = vmatprep.subr.mxu0 0.0
    %275 = vmatpush1.xpose.msra.mxu0 0.0
    %276 = vmatprep.subr.mxu0 0.0
    %277 = vmatpush1.xpose.msra.mxu0 0.0
    %278 = vmatprep.subr.mxu0 0.0
    %279 = vmatpush1.xpose.msra.mxu0 0.0
    %280 = vmatprep.subr.mxu0 0.0
    %281 = vmatpush1.xpose.msra.mxu0 0.0
    %282 = vmatprep.subr.mxu0 0.0
    %283 = vmatpush1.xpose.msra.mxu0 0.0
    %284 = vmatprep.subr.mxu0 0.0
    %285 = vmatpush1.xpose.msra.mxu0 0.0
    %286 = vmatprep.subr.mxu0 0.0
    %287 = vmatpush1.xpose.msra.mxu0 0.0
    %288 = vmatprep.subr.mxu0 0.0
    %289 = vmatpush1.xpose.msra.mxu0 %v256
    %290 = vmatprep.subr.mxu0 0.0
    %291 = vmatpush2.xpose.msra.mxu0 0.0
    %292 = vmatprep.subr.mxu0 0.0
    %293 = vmatpush2.xpose.msra.mxu0 0.0
    %294 = vmatprep.subr.mxu0 0.0
    %295 = vmatpush2.xpose.msra.mxu0 0.0
    %296 = vmatprep.subr.mxu0 0.0
    %297 = vmatpush2.xpose.msra.mxu0 0.0
    %298 = vmatprep.subr.mxu0 0.0
    %299 = vmatpush2.xpose.msra.mxu0 0.0
    %300 = vmatprep.subr.mxu0 0.0
    %301 = vmatpush2.xpose.msra.mxu0 0.0
    %302 = vmatprep.subr.mxu0 0.0
    %303 = vmatpush2.xpose.msra.mxu0 0.0
    %304 = vmatprep.subr.mxu0 0.0
    %305 = vmatpush2.xpose.msra.mxu0 0.0
    %306 = vmatprep.subr.mxu0 0.0
    %307 = vmatpush2.xpose.msra.mxu0 0.0
    %308 = vmatprep.subr.mxu0 0.0
    %309 = vmatpush2.xpose.msra.mxu0 0.0
    %310 = vmatprep.subr.mxu0 0.0
    %311 = vmatpush2.xpose.msra.mxu0 0.0
    %312 = vmatprep.subr.mxu0 0.0
    %313 = vmatpush2.xpose.msra.mxu0 0.0
    %314 = vmatprep.subr.mxu0 0.0
    %315 = vmatpush2.xpose.msra.mxu0 0.0
    %316 = vmatprep.subr.mxu0 0.0
    %317 = vmatpush2.xpose.msra.mxu0 0.0
    %318 = vmatprep.subr.mxu0 0.0
    %319 = vmatpush2.xpose.msra.mxu0 0.0
    %320 = vmatprep.subr.mxu0 0.0
    %321 = vmatpush2.xpose.msra.mxu0 0.0
    %322 = vmatprep.mubr.f32.mxu0 0.0
    %323 = vmatmul.mubr.f32.gmra.mxu0 %v254
    %v324 = vpop.f32.mrf.mxu0
    %v325 = vadd.f32 0.0, %v324
    %v326 = vpop.f32.mrf.mxu0
    %327 = vdwg.mxu0
    %v328 = vmul.f32 %v248, 0.17677669
    %v329 = vmul.f32 %v325, 0.17677669
    %vm330 = vcmask 64512
    %v331 = vsel %vm330, %v328, -inf
    %332 = vmax.xlane.f32.xlu0 %v331
    %v333 = vpop.xlane.xlu0 %332
    %v334 = vsel %vm330, %v329, -inf
    %335 = vmax.xlane.f32.xlu0 %v334
    %v336 = vpop.xlane.xlu0 %335
    %v337 = vsub.f32 %v328, %v333
    %v338 = vsub.f32 %v329, %v336
    %v339 = vmul.f32 %v337, 1.442695
    %v340 = vpow.pop %v339
    %v341 = vmul.f32 %v338, 1.442695
    %v342 = vpow.pop %v341
    %v343 = vsel %vm330, %v340, 0.0
    %344 = vadd.xlane.f32.xlu0 %v343
    %v345 = vpop.xlane.xlu0 %344
    %v346 = vsel %vm330, %v342, 0.0
    %347 = vadd.xlane.f32.xlu0 %v346
    %v348 = vpop.xlane.xlu0 %347
    %v349 = vrcp.pop %v345
    %v350 = vrcp.pop %v348
    %v351 = vmul.f32 %v340, %v349
    %v352 = vmul.f32 %v342, %v350
    %353 = vrot.lane.b32.xlu0 %v166, 64
    %v354 = vpop.permute.xlu0 %353
    %v357 = vsel %vm330, %v351, 0
    %359 = vmatprep.subr.mxu0 0.0
    %360 = vmatpush1.msra.mxu0 0.0
    %361 = vmatprep.subr.mxu0 0.0
    %362 = vmatpush1.msra.mxu0 0.0
    %363 = vmatprep.subr.mxu0 0.0
    %364 = vmatpush1.msra.mxu0 0.0
    %365 = vmatprep.subr.mxu0 0.0
    %366 = vmatpush1.msra.mxu0 0.0
    %367 = vmatprep.subr.mxu0 0.0
    %368 = vmatpush1.msra.mxu0 0.0
    %369 = vmatprep.subr.mxu0 0.0
    %370 = vmatpush1.msra.mxu0 0.0
    %371 = vmatprep.subr.mxu0 0.0
    %372 = vmatpush1.msra.mxu0 0.0
    %373 = vmatprep.subr.mxu0 0.0
    %374 = vmatpush1.msra.mxu0 0.0
    %375 = vmatprep.subr.mxu0 0.0
    %376 = vmatpush1.msra.mxu0 0.0
    %377 = vmatprep.subr.mxu0 0.0
    %378 = vmatpush1.msra.mxu0 0.0
    %379 = vmatprep.subr.mxu0 0.0
    %380 = vmatpush1.msra.mxu0 0.0
    %381 = vmatprep.subr.mxu0 0.0
    %382 = vmatpush1.msra.mxu0 0.0
    %383 = vmatprep.subr.mxu0 0.0
    %384 = vmatpush1.msra.mxu0 0.0
    %385 = vmatprep.subr.mxu0 0.0
    %386 = vmatpush1.msra.mxu0 0.0
    %387 = vmatprep.subr.mxu0 0.0
    %388 = vmatpush1.msra.mxu0 0.0
    %389 = vmatprep.subr.mxu0 0.0
    %390 = vmatpush1.msra.mxu0 %v354
    %391 = vmatprep.subr.mxu0 0.0
    %392 = vmatpush2.msra.mxu0 0.0
    %393 = vmatprep.subr.mxu0 0.0
    %394 = vmatpush2.msra.mxu0 0.0
    %395 = vmatprep.subr.mxu0 0.0
    %396 = vmatpush2.msra.mxu0 0.0
    %397 = vmatprep.subr.mxu0 0.0
    %398 = vmatpush2.msra.mxu0 0.0
    %399 = vmatprep.subr.mxu0 0.0
    %400 = vmatpush2.msra.mxu0 0.0
    %401 = vmatprep.subr.mxu0 0.0
    %402 = vmatpush2.msra.mxu0 0.0
    %403 = vmatprep.subr.mxu0 0.0
    %404 = vmatpush2.msra.mxu0 0.0
    %405 = vmatprep.subr.mxu0 0.0
    %406 = vmatpush2.msra.mxu0 0.0
    %407 = vmatprep.subr.mxu0 0.0
    %408 = vmatpush2.msra.mxu0 0.0
    %409 = vmatprep.subr.mxu0 0.0
    %410 = vmatpush2.msra.mxu0 0.0
    %411 = vmatprep.subr.mxu0 0.0
    %412 = vmatpush2.msra.mxu0 0.0
    %413 = vmatprep.subr.mxu0 0.0
    %414 = vmatpush2.msra.mxu0 0.0
    %415 = vmatprep.subr.mxu0 0.0
    %416 = vmatpush2.msra.mxu0 0.0
    %417 = vmatprep.subr.mxu0 0.0
    %418 = vmatpush2.msra.mxu0 0.0
    %419 = vmatprep.subr.mxu0 0.0
    %420 = vmatpush2.msra.mxu0 0.0
    %421 = vmatprep.subr.mxu0 0.0
    %422 = vmatpush2.msra.mxu0 0.0
    %423 = vmatprep.mubr.f32.mxu0 0.0
    %424 = vmatmul.mubr.f32.gmra.mxu0 %v357
    %v425 = vpop.f32.mrf.mxu0
    %v426 = vadd.f32 0.0, %v425
    %v427 = vpop.f32.mrf.mxu0
    %428 = vdwg.mxu0
    %429 = vrot.lane.b32.xlu0 %v171, 64
    %v430 = vpop.permute.xlu0 %429
    %v433 = vsel %vm330, %v352, 0
    %435 = vmatprep.subr.mxu0 0.0
    %436 = vmatpush1.msra.mxu0 0.0
    %437 = vmatprep.subr.mxu0 0.0
    %438 = vmatpush1.msra.mxu0 0.0
    %439 = vmatprep.subr.mxu0 0.0
    %440 = vmatpush1.msra.mxu0 0.0
    %441 = vmatprep.subr.mxu0 0.0
    %442 = vmatpush1.msra.mxu0 0.0
    %443 = vmatprep.subr.mxu0 0.0
    %444 = vmatpush1.msra.mxu0 0.0
    %445 = vmatprep.subr.mxu0 0.0
    %446 = vmatpush1.msra.mxu0 0.0
    %447 = vmatprep.subr.mxu0 0.0
    %448 = vmatpush1.msra.mxu0 0.0
    %449 = vmatprep.subr.mxu0 0.0
    %450 = vmatpush1.msra.mxu0 0.0
    %451 = vmatprep.subr.mxu0 0.0
    %452 = vmatpush1.msra.mxu0 0.0
    %453 = vmatprep.subr.mxu0 0.0
    %454 = vmatpush1.msra.mxu0 0.0
    %455 = vmatprep.subr.mxu0 0.0
    %456 = vmatpush1.msra.mxu0 0.0
    %457 = vmatprep.subr.mxu0 0.0
    %458 = vmatpush1.msra.mxu0 0.0
    %459 = vmatprep.subr.mxu0 0.0
    %460 = vmatpush1.msra.mxu0 0.0
    %461 = vmatprep.subr.mxu0 0.0
    %462 = vmatpush1.msra.mxu0 0.0
    %463 = vmatprep.subr.mxu0 0.0
    %464 = vmatpush1.msra.mxu0 0.0
    %465 = vmatprep.subr.mxu0 0.0
    %466 = vmatpush1.msra.mxu0 %v430
    %467 = vmatprep.subr.mxu0 0.0
    %468 = vmatpush2.msra.mxu0 0.0
    %469 = vmatprep.subr.mxu0 0.0
    %470 = vmatpush2.msra.mxu0 0.0
    %471 = vmatprep.subr.mxu0 0.0
    %472 = vmatpush2.msra.mxu0 0.0
    %473 = vmatprep.subr.mxu0 0.0
    %474 = vmatpush2.msra.mxu0 0.0
    %475 = vmatprep.subr.mxu0 0.0
    %476 = vmatpush2.msra.mxu0 0.0
    %477 = vmatprep.subr.mxu0 0.0
    %478 = vmatpush2.msra.mxu0 0.0
    %479 = vmatprep.subr.mxu0 0.0
    %480 = vmatpush2.msra.mxu0 0.0
    %481 = vmatprep.subr.mxu0 0.0
    %482 = vmatpush2.msra.mxu0 0.0
    %483 = vmatprep.subr.mxu0 0.0
    %484 = vmatpush2.msra.mxu0 0.0
    %485 = vmatprep.subr.mxu0 0.0
    %486 = vmatpush2.msra.mxu0 0.0
    %487 = vmatprep.subr.mxu0 0.0
    %488 = vmatpush2.msra.mxu0 0.0
    %489 = vmatprep.subr.mxu0 0.0
    %490 = vmatpush2.msra.mxu0 0.0
    %491 = vmatprep.subr.mxu0 0.0
    %492 = vmatpush2.msra.mxu0 0.0
    %493 = vmatprep.subr.mxu0 0.0
    %494 = vmatpush2.msra.mxu0 0.0
    %495 = vmatprep.subr.mxu0 0.0
    %496 = vmatpush2.msra.mxu0 0.0
    %497 = vmatprep.subr.mxu0 0.0
    %498 = vmatpush2.msra.mxu0 0.0
    %499 = vmatprep.mubr.f32.mxu0 0.0
    %500 = vmatmul.mubr.f32.gmra.mxu0 %v433
    %v501 = vpop.f32.mrf.mxu0
    %v502 = vadd.f32 0.0, %v501
    %v503 = vpop.f32.mrf.mxu0
    %504 = vdwg.mxu0
    %v505 = vld [vmem:[#allocation2] sm:$0xff]
    %v506 = vld [vmem:[#allocation2 + $0x8] sm:$0xff]
    %v507 = vld [vmem:[#allocation2 + $0x10] sm:$0xff]
    %v508 = vld [vmem:[#allocation2 + $0x18] sm:$0xff]
    %v509 = vld [vmem:[%s5] sm:$0x1]
    %v511 = vlaneseq
    %v512 = vshrl.u32 %v511, 7
    %v513 = vsub.s32 0, %v512
    %v514 = vrot.slane %v509, %v513
    %v517 = vsel %vm92, %v426, 0
    %v520 = vsel %vm92, %v502, 0
    %522 = vmatprep.subr.mxu0 0.0
    %523 = vmatpush1.msra.mxu0 0.0
    %524 = vmatprep.subr.mxu0 0.0
    %525 = vmatpush1.msra.mxu0 0.0
    %526 = vmatprep.subr.mxu0 0.0
    %527 = vmatpush1.msra.mxu0 0.0
    %528 = vmatprep.subr.mxu0 0.0
    %529 = vmatpush1.msra.mxu0 0.0
    %530 = vmatprep.subr.mxu0 0.0
    %531 = vmatpush1.msra.mxu0 0.0
    %532 = vmatprep.subr.mxu0 0.0
    %533 = vmatpush1.msra.mxu0 0.0
    %534 = vmatprep.subr.mxu0 0.0
    %535 = vmatpush1.msra.mxu0 0.0
    %536 = vmatprep.subr.mxu0 0.0
    %537 = vmatpush1.msra.mxu0 0.0
    %538 = vmatprep.subr.mxu0 0.0
    %539 = vmatpush1.msra.mxu0 0.0
    %540 = vmatprep.subr.mxu0 0.0
    %541 = vmatpush1.msra.mxu0 0.0
    %542 = vmatprep.subr.mxu0 0.0
    %543 = vmatpush1.msra.mxu0 0.0
    %544 = vmatprep.subr.mxu0 0.0
    %545 = vmatpush1.msra.mxu0 0.0
    %546 = vmatprep.subr.mxu0 0.0
    %547 = vmatpush1.msra.mxu0 %v508
    %548 = vmatprep.subr.mxu0 0.0
    %549 = vmatpush1.msra.mxu0 %v507
    %550 = vmatprep.subr.mxu0 0.0
    %551 = vmatpush1.msra.mxu0 %v506
    %552 = vmatprep.subr.mxu0 0.0
    %553 = vmatpush1.msra.mxu0 %v505
    %554 = vmatprep.subr.mxu0 0.0
    %555 = vmatpush2.msra.mxu0 0.0
    %556 = vmatprep.subr.mxu0 0.0
    %557 = vmatpush2.msra.mxu0 0.0
    %558 = vmatprep.subr.mxu0 0.0
    %559 = vmatpush2.msra.mxu0 0.0
    %560 = vmatprep.subr.mxu0 0.0
    %561 = vmatpush2.msra.mxu0 0.0
    %562 = vmatprep.subr.mxu0 0.0
    %563 = vmatpush2.msra.mxu0 0.0
    %564 = vmatprep.subr.mxu0 0.0
    %565 = vmatpush2.msra.mxu0 0.0
    %566 = vmatprep.subr.mxu0 0.0
    %567 = vmatpush2.msra.mxu0 0.0
    %568 = vmatprep.subr.mxu0 0.0
    %569 = vmatpush2.msra.mxu0 0.0
    %570 = vmatprep.subr.mxu0 0.0
    %571 = vmatpush2.msra.mxu0 0.0
    %572 = vmatprep.subr.mxu0 0.0
    %573 = vmatpush2.msra.mxu0 0.0
    %574 = vmatprep.subr.mxu0 0.0
    %575 = vmatpush2.msra.mxu0 0.0
    %576 = vmatprep.subr.mxu0 0.0
    %577 = vmatpush2.msra.mxu0 0.0
    %578 = vmatprep.subr.mxu0 0.0
    %579 = vmatpush2.msra.mxu0 0.0
    %580 = vmatprep.subr.mxu0 0.0
    %581 = vmatpush2.msra.mxu0 0.0
    %582 = vmatprep.subr.mxu0 0.0
    %583 = vmatpush2.msra.mxu0 0.0
    %584 = vmatprep.subr.mxu0 0.0
    %585 = vmatpush2.msra.mxu0 0.0
    %586 = vmatprep.mubr.f32.mxu0 0.0
    %587 = vmatmul.mubr.f32.gmra.mxu0 %v517
    %v588 = vpop.f32.mrf.mxu0
    %v589 = vadd.f32 %v514, %v588
    %v590 = vpop.f32.mrf.mxu0
    %591 = vmatprep.mubr.f32.mxu0 0.0
    %592 = vmatmul.mubr.f32.gmra.mxu0 %v520
    %v593 = vpop.f32.mrf.mxu0
    %v594 = vadd.f32 %v514, %v593
    %v595 = vpop.f32.mrf.mxu0
    %596 = vdwg.mxu0
    %v597 = vld [vmem:[%s10] sm:$0x1]
    %v598 = vld [vmem:[%s11] sm:$0x1]
    %v599 = vadd.f32 %v79, %v589
    %v600 = vadd.f32 %v80, %v594
    %v601 = vsel %vm92, %v599, 0.0
    %602 = vadd.xlane.f32.xlu0 %v601
    %v603 = vpop.xlane.xlu0 %602
    %v604 = vsel %vm92, %v600, 0.0
    %605 = vadd.xlane.f32.xlu0 %v604
    %v606 = vpop.xlane.xlu0 %605
    %v607 = vrcp.pop 32.0
    %v608 = vmul.f32 %v603, %v607
    %v609 = vmul.f32 %v606, %v607
    %v610 = vmul.f32 %v599, %v599
    %v611 = vmul.f32 %v600, %v600
    %v612 = vsel %vm92, %v610, 0.0
    %613 = vadd.xlane.f32.xlu0 %v612
    %v614 = vpop.xlane.xlu0 %613
    %v615 = vsel %vm92, %v611, 0.0
    %616 = vadd.xlane.f32.xlu0 %v615
    %v617 = vpop.xlane.xlu0 %616
    %v618 = vmul.f32 %v614, %v607
    %v619 = vmul.f32 %v617, %v607
    %v620 = vmul.f32 %v608, %v608
    %v621 = vmul.f32 %v609, %v609
    %v622 = vsub.f32 %v618, %v620
    %v623 = vsub.f32 %v619, %v621
    %v624 = vsub.f32 %v599, %v608
    %v625 = vsub.f32 %v600, %v609
    %v626 = vadd.f32 %v622, 1e-05
    %v627 = vadd.f32 %v623, 1e-05
    %v628 = vrsqrt.pop %v626
    %v629 = vrsqrt.pop %v627
    %v630 = vmul.f32 %v624, %v628
    %v631 = vmul.f32 %v625, %v629
    %v633 = vlaneseq
    %v634 = vshrl.u32 %v633, 7
    %v635 = vsub.s32 0, %v634
    %v636 = vrot.slane %v597, %v635
    %v638 = vmul.f32 %v630, %v636
    %v639 = vmul.f32 %v631, %v636
    %v641 = vlaneseq
    %v642 = vshrl.u32 %v641, 7
    %v643 = vsub.s32 0, %v642
    %v644 = vrot.slane %v598, %v643
    %v646 = vadd.f32 %v638, %v644
    %v647 = vadd.f32 %v639, %v644
    %v648 = vld [vmem:[%s6] sm:$0xff]
    %v649 = vld [vmem:[%s6 + $0x8] sm:$0xff]
    %v650 = vld [vmem:[%s6 + $0x10] sm:$0xff]
    %v651 = vld [vmem:[%s6 + $0x18] sm:$0xff]
    %v652 = vld [vmem:[%s7] sm:$0x1]
    %v654 = vlaneseq
    %v655 = vshrl.u32 %v654, 7
    %v656 = vsub.s32 0, %v655
    %v657 = vrot.slane %v652, %v656
    %v660 = vsel %vm92, %v646, 0
    %v663 = vsel %vm92, %v647, 0
    %665 = vmatprep.subr.mxu0 0.0
    %666 = vmatpush1.msra.mxu0 0.0
    %667 = vmatprep.subr.mxu0 0.0
    %668 = vmatpush1.msra.mxu0 0.0
    %669 = vmatprep.subr.mxu0 0.0
    %670 = vmatpush1.msra.mxu0 0.0
    %671 = vmatprep.subr.mxu0 0.0
    %672 = vmatpush1.msra.mxu0 0.0
    %673 = vmatprep.subr.mxu0 0.0
    %674 = vmatpush1.msra.mxu0 0.0
    %675 = vmatprep.subr.mxu0 0.0
    %676 = vmatpush1.msra.mxu0 0.0
    %677 = vmatprep.subr.mxu0 0.0
    %678 = vmatpush1.msra.mxu0 0.0
    %679 = vmatprep.subr.mxu0 0.0
    %680 = vmatpush1.msra.mxu0 0.0
    %681 = vmatprep.subr.mxu0 0.0
    %682 = vmatpush1.msra.mxu0 0.0
    %683 = vmatprep.subr.mxu0 0.0
    %684 = vmatpush1.msra.mxu0 0.0
    %685 = vmatprep.subr.mxu0 0.0
    %686 = vmatpush1.msra.mxu0 0.0
    %687 = vmatprep.subr.mxu0 0.0
    %688 = vmatpush1.msra.mxu0 0.0
    %689 = vmatprep.subr.mxu0 0.0
    %690 = vmatpush1.msra.mxu0 %v651
    %691 = vmatprep.subr.mxu0 0.0
    %692 = vmatpush1.msra.mxu0 %v650
    %693 = vmatprep.subr.mxu0 0.0
    %694 = vmatpush1.msra.mxu0 %v649
    %695 = vmatprep.subr.mxu0 0.0
    %696 = vmatpush1.msra.mxu0 %v648
    %697 = vmatprep.subr.mxu0 0.0
    %698 = vmatpush2.msra.mxu0 0.0
    %699 = vmatprep.subr.mxu0 0.0
    %700 = vmatpush2.msra.mxu0 0.0
    %701 = vmatprep.subr.mxu0 0.0
    %702 = vmatpush2.msra.mxu0 0.0
    %703 = vmatprep.subr.mxu0 0.0
    %704 = vmatpush2.msra.mxu0 0.0
    %705 = vmatprep.subr.mxu0 0.0
    %706 = vmatpush2.msra.mxu0 0.0
    %707 = vmatprep.subr.mxu0 0.0
    %708 = vmatpush2.msra.mxu0 0.0
    %709 = vmatprep.subr.mxu0 0.0
    %710 = vmatpush2.msra.mxu0 0.0
    %711 = vmatprep.subr.mxu0 0.0
    %712 = vmatpush2.msra.mxu0 0.0
    %713 = vmatprep.subr.mxu0 0.0
    %714 = vmatpush2.msra.mxu0 0.0
    %715 = vmatprep.subr.mxu0 0.0
    %716 = vmatpush2.msra.mxu0 0.0
    %717 = vmatprep.subr.mxu0 0.0
    %718 = vmatpush2.msra.mxu0 0.0
    %719 = vmatprep.subr.mxu0 0.0
    %720 = vmatpush2.msra.mxu0 0.0
    %721 = vmatprep.subr.mxu0 0.0
    %722 = vmatpush2.msra.mxu0 0.0
    %723 = vmatprep.subr.mxu0 0.0
    %724 = vmatpush2.msra.mxu0 0.0
    %725 = vmatprep.subr.mxu0 0.0
    %726 = vmatpush2.msra.mxu0 0.0
    %727 = vmatprep.subr.mxu0 0.0
    %728 = vmatpush2.msra.mxu0 0.0
    %729 = vmatprep.mubr.f32.mxu0 0.0
    %730 = vmatmul.mubr.f32.gmra.mxu0 %v660
    %v731 = vpop.f32.mrf.mxu0
    %v732 = vadd.f32 %v657, %v731
    %v733 = vpop.f32.mrf.mxu0
    %734 = vmatprep.mubr.f32.mxu0 0.0
    %735 = vmatmul.mubr.f32.gmra.mxu0 %v663
    %v736 = vpop.f32.mrf.mxu0
    %v737 = vadd.f32 %v657, %v736
    %v738 = vpop.f32.mrf.mxu0
    %739 = vdwg.mxu0
    %v740 = vmax.f32 %v732, 0.0
    %v741 = vmax.f32 %v737, 0.0
    %v742 = vld [vmem:[#allocation5] sm:$0xff]
    %v743 = vld [vmem:[#allocation5 + $0x8] sm:$0xff]
    %v744 = vld [vmem:[%s9] sm:$0x1]
    %v746 = vlaneseq
    %v747 = vshrl.u32 %v746, 7
    %v748 = vsub.s32 0, %v747
    %v749 = vrot.slane %v744, %v748
    %vm751 = vcmask 130048
    %v753 = vsel %vm751, %v740, 0
    %v756 = vsel %vm751, %v741, 0
    %758 = vmatprep.subr.mxu0 0.0
    %759 = vmatpush1.msra.mxu0 0.0
    %760 = vmatprep.subr.mxu0 0.0
    %761 = vmatpush1.msra.mxu0 0.0
    %762 = vmatprep.subr.mxu0 0.0
    %763 = vmatpush1.msra.mxu0 0.0
    %764 = vmatprep.subr.mxu0 0.0
    %765 = vmatpush1.msra.mxu0 0.0
    %766 = vmatprep.subr.mxu0 0.0
    %767 = vmatpush1.msra.mxu0 0.0
    %768 = vmatprep.subr.mxu0 0.0
    %769 = vmatpush1.msra.mxu0 0.0
    %770 = vmatprep.subr.mxu0 0.0
    %771 = vmatpush1.msra.mxu0 0.0
    %772 = vmatprep.subr.mxu0 0.0
    %773 = vmatpush1.msra.mxu0 0.0
    %774 = vmatprep.subr.mxu0 0.0
    %775 = vmatpush1.msra.mxu0 0.0
    %776 = vmatprep.subr.mxu0 0.0
    %777 = vmatpush1.msra.mxu0 0.0
    %778 = vmatprep.subr.mxu0 0.0
    %779 = vmatpush1.msra.mxu0 0.0
    %780 = vmatprep.subr.mxu0 0.0
    %781 = vmatpush1.msra.mxu0 0.0
    %782 = vmatprep.subr.mxu0 0.0
    %783 = vmatpush1.msra.mxu0 0.0
    %784 = vmatprep.subr.mxu0 0.0
    %785 = vmatpush1.msra.mxu0 0.0
    %786 = vmatprep.subr.mxu0 0.0
    %787 = vmatpush1.msra.mxu0 %v743
    %788 = vmatprep.subr.mxu0 0.0
    %789 = vmatpush1.msra.mxu0 %v742
    %790 = vmatprep.subr.mxu0 0.0
    %791 = vmatpush2.msra.mxu0 0.0
    %792 = vmatprep.subr.mxu0 0.0
    %793 = vmatpush2.msra.mxu0 0.0
    %794 = vmatprep.subr.mxu0 0.0
    %795 = vmatpush2.msra.mxu0 0.0
    %796 = vmatprep.subr.mxu0 0.0
    %797 = vmatpush2.msra.mxu0 0.0
    %798 = vmatprep.subr.mxu0 0.0
    %799 = vmatpush2.msra.mxu0 0.0
    %800 = vmatprep.subr.mxu0 0.0
    %801 = vmatpush2.msra.mxu0 0.0
    %802 = vmatprep.subr.mxu0 0.0
    %803 = vmatpush2.msra.mxu0 0.0
    %804 = vmatprep.subr.mxu0 0.0
    %805 = vmatpush2.msra.mxu0 0.0
    %806 = vmatprep.subr.mxu0 0.0
    %807 = vmatpush2.msra.mxu0 0.0
    %808 = vmatprep.subr.mxu0 0.0
    %809 = vmatpush2.msra.mxu0 0.0
    %810 = vmatprep.subr.mxu0 0.0
    %811 = vmatpush2.msra.mxu0 0.0
    %812 = vmatprep.subr.mxu0 0.0
    %813 = vmatpush2.msra.mxu0 0.0
    %814 = vmatprep.subr.mxu0 0.0
    %815 = vmatpush2.msra.mxu0 0.0
    %816 = vmatprep.subr.mxu0 0.0
    %817 = vmatpush2.msra.mxu0 0.0
    %818 = vmatprep.subr.mxu0 0.0
    %819 = vmatpush2.msra.mxu0 0.0
    %820 = vmatprep.subr.mxu0 0.0
    %821 = vmatpush2.msra.mxu0 0.0
    %822 = vmatprep.mubr.f32.mxu0 0.0
    %823 = vmatmul.mubr.f32.gmra.mxu0 %v753
    %v824 = vpop.f32.mrf.mxu0
    %v825 = vadd.f32 %v749, %v824
    %v826 = vpop.f32.mrf.mxu0
    %827 = vmatprep.mubr.f32.mxu0 0.0
    %828 = vmatmul.mubr.f32.gmra.mxu0 %v756
    %v829 = vpop.f32.mrf.mxu0
    %v830 = vadd.f32 %v749, %v829
    %v831 = vpop.f32.mrf.mxu0
    %832 = vdwg.mxu0
    %v833 = vadd.f32 %v646, %v825
    %v834 = vadd.f32 %v647, %v830
    %v835 = vsel %vm92, %v833, 0.0
    %836 = vadd.xlane.f32.xlu0 %v835
    %v837 = vpop.xlane.xlu0 %836
    %v838 = vsel %vm92, %v834, 0.0
    %839 = vadd.xlane.f32.xlu0 %v838
    %v840 = vpop.xlane.xlu0 %839
    %v841 = vmul.f32 %v837, %v607
    %v842 = vmul.f32 %v840, %v607
    %v843 = vmul.f32 %v833, %v833
    %v844 = vmul.f32 %v834, %v834
    %v845 = vsel %vm92, %v843, 0.0
    %846 = vadd.xlane.f32.xlu0 %v845
    %v847 = vpop.xlane.xlu0 %846
    %v848 = vsel %vm92, %v844, 0.0
    %849 = vadd.xlane.f32.xlu0 %v848
    %v850 = vpop.xlane.xlu0 %849
    %v851 = vmul.f32 %v847, %v607
    %v852 = vmul.f32 %v850, %v607
    %v853 = vmul.f32 %v841, %v841
    %v854 = vmul.f32 %v842, %v842
    %v855 = vsub.f32 %v851, %v853
    %v856 = vsub.f32 %v852, %v854
    %v857 = vsub.f32 %v833, %v841
    %v858 = vsub.f32 %v834, %v842
    %v859 = vadd.f32 %v855, 1e-05
    %v860 = vadd.f32 %v856, 1e-05
    %v861 = vrsqrt.pop %v859
    %v862 = vrsqrt.pop %v860
    %v863 = vmul.f32 %v857, %v861
    %v864 = vmul.f32 %v858, %v862
    %v865 = vmul.f32 %v863, %v636
    %v866 = vmul.f32 %v864, %v636
    %v867 = vadd.f32 %v865, %v644
    %v868 = vadd.f32 %v866, %v644
    %869 = vst.msk [vmem:[#allocation7] sm:$0xff] %vm92, %v867
    %870 = vst.msk [vmem:[#allocation7 + $0x8] sm:$0xff] %vm92, %v868
    // Predicated region
    $region58: #{tpu_custom_call.1} parent=1 // pred_check
      _
    $region59: #{tpu_custom_call.1} parent=1 // pred_check_branch
      %872 = sbr.rel (0) target = $region61
    $region60: #{tpu_custom_call.1} parent=1 // pred_region
      %s874 = ssub.s32 256, 256
      %875 = vsyncadd [#allocation4], %s874
      %s876 = sshll.u32 [#allocation7], 4
      %s877 = int_to_ptr.vmem [resolvable:$true] %s876
      %882 = dma.vmem_to_hbm [thread:$0]  %s877, 256, %s12, [#allocation4], 128, 128, 8
    $region61: #{tpu_custom_call.1} parent=1 // pred_fallthru
      _
    // Predicated region
    $region62: #{tpu_custom_call.1} parent=1 // pred_check
      _
    $region63: #{tpu_custom_call.1} parent=1 // pred_check_branch
      %884 = sbr.rel (0) target = $region65
    $region64: #{tpu_custom_call.1} parent=1 // pred_region
      %885 = dma.done [#allocation4], 256
    $region65: #{tpu_custom_call.1} parent=1 // pred_fallthru
      _
    %886 = vsyncpa [#allocation3], 1
    %887 = vsyncpa [#allocation6], 1
    %888 = vsyncpa [#allocation4], 1

</llo_original>
